<compile_context>
chip_gen: v7x
topology: tpu7x:2x2x1
jax: 0.10.0
libtpu: 0.0.40
codegen_flags: <defaults>
</compile_context>

<pallas_src>
import jax
import jax.numpy as jnp
from jax.experimental import pallas as pl
from jax.experimental.pallas import tpu as pltpu

EPS = 1e-5  # PyTorch nn.LayerNorm default


def _tensorcores_per_chip():
    """2 for megacore chips (v4 / v5p / v7x), 1 for v5e / v6e."""
    try:
        kind = jax.devices()[0].device_kind.lower()
    except Exception:
        return 1
    return 2 if any(t in kind for t in ("v4", "v5p", "v7")) else 1


def _sandwich_norm_kernel(x_ref, w_ref, p_ref, o_ref):
    x = x_ref[...].astype(jnp.float32)

    # --- prenorm: LayerNorm over last dim (two-pass variance, f32 stats) ---
    mu = jnp.mean(x, axis=-1, keepdims=True)
    xc = x - mu
    var = jnp.mean(xc * xc, axis=-1, keepdims=True)
    xh = xc * jax.lax.rsqrt(var + EPS)
    # (prenorm affine g1,b1 is folded into w_ref / p_ref[0] by the wrapper)

    # --- fn: dense linear (dim -> dim) on the MXU, bf16 in / f32 accumulate ---
    p = p_ref[...]  # (3, D) f32: [b_folded, g2, b2]
    y = jnp.dot(xh.astype(jnp.bfloat16), w_ref[...],
                preferred_element_type=jnp.float32)
    y = y + p[0:1, :]

    # --- postnorm: LayerNorm over last dim ---
    mu2 = jnp.mean(y, axis=-1, keepdims=True)
    yc = y - mu2
    var2 = jnp.mean(yc * yc, axis=-1, keepdims=True)
    yh = yc * jax.lax.rsqrt(var2 + EPS)
    o_ref[...] = (yh * p[1:2, :] + p[2:3, :]).astype(o_ref.dtype)


def sandwich_norm(x, g1, b1, w, wb, g2, b2, *, tm=None):
    """x: (B, S, D). Params: g1,b1,g2,b2: (D,), w: (D, D), wb: (D,).

    Output dtype matches x.dtype (LayerNorm stats are computed in f32 inside
    the kernel regardless of input dtype).
    """
    B, S, D = x.shape
    rows = B * S
    x2 = x.reshape(rows, D)
    x_item = x2.dtype.itemsize
    out_item = x_item  # output dtype == input dtype

    # Fold prenorm affine + linear bias into the weights (exact algebra):
    #   (xh*g1 + b1) @ w + wb == xh @ (g1[:,None]*w) + (b1 @ w + wb)
    w_folded = (g1[:, None] * w).astype(jnp.bfloat16)                 # (D, D)
    b_folded = (b1.astype(jnp.float32) @ w.astype(jnp.float32)
                + wb.astype(jnp.float32))                             # (D,)
    params = jnp.stack([b_folded, g2.astype(jnp.float32),
                        b2.astype(jnp.float32)], axis=0)              # (3, D)

    # Resident weight/params: single-buffer them when they are big enough to
    # matter (their index_maps are constant, nothing to pipeline).
    single_buffer_resident = D >= 1024
    w_bufs = 1 if single_buffer_resident else 2

    # ---- Row tile sized by bytes: target ~4 MiB of input per grid step. ----
    if tm is None:
        tm = max(256, (4 << 20) // (D * x_item))
        tm = min(tm, 4096)
    tm_eff = min(tm, rows)
    if tm_eff < rows:
        # Partial tiles must keep the sublane constraint (multiple of 8);
        # a tile equal to the full row count is always allowed.
        tm_eff = max(8, (tm_eff // 8) * 8)

    def _vmem_bytes(t):
        return (2 * t * D * x_item          # double-buffered input tile
                + 2 * t * D * out_item      # double-buffered output tile
                + w_bufs * D * D * 2        # bf16 weight
                + 2 * 3 * D * 4)            # params

    # Keep all buffers inside a v7x-safe budget (64 MiB physical VMEM).
    budget = 48 << 20
    while _vmem_bytes(tm_eff) > budget and tm_eff % 16 == 0 and tm_eff > 8:
        tm_eff //= 2

    # Megacore: only split the parallel axis further on chips that actually
    # have 2 TensorCores; on single-TC chips the grid is a serial loop.
    if (_tensorcores_per_chip() >= 2 and pl.cdiv(rows, tm_eff) < 2
            and tm_eff % 16 == 0):
        tm_eff //= 2

    grid = (pl.cdiv(rows, tm_eff),)

    row_spec = pl.BlockSpec((tm_eff, D), lambda i: (i, 0))
    if single_buffer_resident:
        mat_spec = pl.BlockSpec((D, D), lambda i: (0, 0),
                                pipeline_mode=pl.Buffered(1))
        par_spec = pl.BlockSpec((3, D), lambda i: (0, 0),
                                pipeline_mode=pl.Buffered(1))
    else:
        mat_spec = pl.BlockSpec((D, D), lambda i: (0, 0))
        par_spec = pl.BlockSpec((3, D), lambda i: (0, 0))

    vmem_limit = int(min(max(32 << 20,
                             int(_vmem_bytes(tm_eff) * 1.25) + (2 << 20)),
                         64 << 20))

    cost = pl.CostEstimate(
        flops=2 * rows * D * D,
        transcendentals=2 * rows,  # one rsqrt per row per norm
        bytes_accessed=rows * D * (x_item + out_item) + D * D * 2 + 3 * D * 4,
    )

    out = pl.pallas_call(
        _sandwich_norm_kernel,
        out_shape=jax.ShapeDtypeStruct((rows, D), x.dtype),
        grid_spec=pltpu.PrefetchScalarGridSpec(
            num_scalar_prefetch=0,
            grid=grid,
            in_specs=[row_spec, mat_spec, par_spec],
            out_specs=row_spec,
        ),
        compiler_params=pltpu.CompilerParams(
            dimension_semantics=("parallel",),
            vmem_limit_bytes=vmem_limit),
        cost_estimate=cost,
    )(x2, w_folded, params)

    return out.reshape(B, S, D)


def _reference(x, g1, b1, w, wb, g2, b2):
    def ln(z, g, b):
        mu = jnp.mean(z, axis=-1, keepdims=True)
        var = jnp.mean((z - mu) ** 2, axis=-1, keepdims=True)
        return (z - mu) * jax.lax.rsqrt(var + EPS) * g + b

    h = ln(x, g1, b1)
    h = jnp.einsum("bsd,de->bse", h, w) + wb
    return ln(h, g2, b2)


if __name__ == "__main__":
    B, S, D = 2, 8, 128
    key = jax.random.PRNGKey(0)
    kx, kg1, kb1, kw, kwb, kg2, kb2 = jax.random.split(key, 7)

    x = jax.random.normal(kx, (B, S, D), dtype=jnp.float32)
    # Deterministic synthetic parameters (LayerNorm affines + linear fn).
    g1 = 1.0 + 0.1 * jax.random.normal(kg1, (D,), dtype=jnp.float32)
    b1 = 0.1 * jax.random.normal(kb1, (D,), dtype=jnp.float32)
    w = jax.random.normal(kw, (D, D), dtype=jnp.float32) / jnp.sqrt(D)
    wb = 0.1 * jax.random.normal(kwb, (D,), dtype=jnp.float32)
    g2 = 1.0 + 0.1 * jax.random.normal(kg2, (D,), dtype=jnp.float32)
    b2 = 0.1 * jax.random.normal(kb2, (D,), dtype=jnp.float32)

    out = sandwich_norm(x, g1, b1, w, wb, g2, b2)
    jax.block_until_ready(out)
    ref = _reference(x, g1, b1, w, wb, g2, b2)
    # bf16 matmul inputs (f32 accumulation) -> looser tolerance than pure f32.
    assert jnp.allclose(out, ref, atol=3e-2, rtol=3e-2), "mismatch vs reference"

    # Also exercise the no-pad ragged tail: rows % tile != 0 -> trailing
    # partial block (OOB reads harmless, OOB writes dropped).
    x3 = jax.random.normal(kx, (3, 5, D), dtype=jnp.float32)
    out3 = sandwich_norm(x3, g1, b1, w, wb, g2, b2, tm=8)
    jax.block_until_ready(out3)
    ref3 = _reference(x3, g1, b1, w, wb, g2, b2)
    assert jnp.allclose(out3, ref3, atol=3e-2, rtol=3e-2), "ragged tail mismatch"

    print("KERNEL_OK")
</pallas_src>

<mosaic_0001>
module attributes {stable_mosaic.version = 11 : i64} {
  func.func @_sandwich_norm_kernel(%arg0: i32, %arg1: memref<16x128xf32, #tpu.memory_space<vmem>>, %arg2: memref<128x128xbf16, #tpu.memory_space<vmem>>, %arg3: memref<3x128xf32, #tpu.memory_space<vmem>>, %arg4: memref<16x128xf32, #tpu.memory_space<vmem>>) attributes {dimension_semantics = [#tpu.dimension_semantics<parallel>], iteration_bounds = array<i64: 1>, scalar_prefetch = 0 : i64, scratch_operands = 0 : i64, tpu.core_type = #tpu.core_type<tc>, window_params = [{transform_indices = @transform_0, window_bounds = array<i64: 16, 128>}, {pipeline_mode = #tpu.pipeline_mode<synchronous>, transform_indices = @transform_1, window_bounds = array<i64: 128, 128>}, {pipeline_mode = #tpu.pipeline_mode<synchronous>, transform_indices = @transform_2, window_bounds = array<i64: 3, 128>}, {transform_indices = @transform_3, window_bounds = array<i64: 16, 128>}]} {
    %c0 = arith.constant 0 : index
    %c0_0 = arith.constant 0 : index
    %0 = vector.load %arg1[%c0, %c0_0] : memref<16x128xf32, #tpu.memory_space<vmem>>, vector<16x128xf32>
    %cst = arith.constant dense<0.000000e+00> : vector<16xf32>
    %1 = vector.multi_reduction <add>, %0, %cst [1] : vector<16x128xf32> to vector<16xf32>
    %2 = vector.shape_cast %1 : vector<16xf32> to vector<16x1xf32>
    %cst_1 = arith.constant 1.280000e+02 : f32
    %3 = vector.broadcast %cst_1 : f32 to vector<16x1xf32>
    %4 = arith.divf %2, %3 : vector<16x1xf32>
    %5 = vector.broadcast %4 : vector<16x1xf32> to vector<16x128xf32>
    %6 = arith.subf %0, %5 : vector<16x128xf32>
    %7 = arith.mulf %6, %6 : vector<16x128xf32>
    %cst_2 = arith.constant dense<0.000000e+00> : vector<16xf32>
    %8 = vector.multi_reduction <add>, %7, %cst_2 [1] : vector<16x128xf32> to vector<16xf32>
    %9 = vector.shape_cast %8 : vector<16xf32> to vector<16x1xf32>
    %cst_3 = arith.constant 1.280000e+02 : f32
    %10 = vector.broadcast %cst_3 : f32 to vector<16x1xf32>
    %11 = arith.divf %9, %10 : vector<16x1xf32>
    %cst_4 = arith.constant 9.99999974E-6 : f32
    %12 = vector.broadcast %cst_4 : f32 to vector<16x1xf32>
    %13 = arith.addf %11, %12 : vector<16x1xf32>
    %14 = math.rsqrt %13 : vector<16x1xf32>
    %15 = vector.broadcast %14 : vector<16x1xf32> to vector<16x128xf32>
    %16 = arith.mulf %6, %15 : vector<16x128xf32>
    %c0_5 = arith.constant 0 : index
    %c0_6 = arith.constant 0 : index
    %17 = vector.load %arg3[%c0_5, %c0_6] : memref<3x128xf32, #tpu.memory_space<vmem>>, vector<3x128xf32>
    %18 = arith.truncf %16 : vector<16x128xf32> to vector<16x128xbf16>
    %c0_7 = arith.constant 0 : index
    %c0_8 = arith.constant 0 : index
    %19 = vector.load %arg2[%c0_7, %c0_8] : memref<128x128xbf16, #tpu.memory_space<vmem>>, vector<128x128xbf16>
    %cst_9 = arith.constant dense<0.000000e+00> : vector<16x128xf32>
    %20 = tpu.matmul %18, %19, %cst_9 {dimension_numbers = #tpu.dot_dimension_numbers<[1], [0], [0], [1], [0, 0, 1, 1], [], []>} : vector<16x128xbf16>, vector<128x128xbf16>, vector<16x128xf32> -> vector<16x128xf32>
    %21 = vector.extract_strided_slice %17 {offsets = [0, 0], sizes = [1, 128], strides = [1, 1]} : vector<3x128xf32> to vector<1x128xf32>
    %22 = vector.broadcast %21 : vector<1x128xf32> to vector<16x128xf32>
    %23 = arith.addf %20, %22 : vector<16x128xf32>
    %cst_10 = arith.constant dense<0.000000e+00> : vector<16xf32>
    %24 = vector.multi_reduction <add>, %23, %cst_10 [1] : vector<16x128xf32> to vector<16xf32>
    %25 = vector.shape_cast %24 : vector<16xf32> to vector<16x1xf32>
    %cst_11 = arith.constant 1.280000e+02 : f32
    %26 = vector.broadcast %cst_11 : f32 to vector<16x1xf32>
    %27 = arith.divf %25, %26 : vector<16x1xf32>
    %28 = vector.broadcast %27 : vector<16x1xf32> to vector<16x128xf32>
    %29 = arith.subf %23, %28 : vector<16x128xf32>
    %30 = arith.mulf %29, %29 : vector<16x128xf32>
    %cst_12 = arith.constant dense<0.000000e+00> : vector<16xf32>
    %31 = vector.multi_reduction <add>, %30, %cst_12 [1] : vector<16x128xf32> to vector<16xf32>
    %32 = vector.shape_cast %31 : vector<16xf32> to vector<16x1xf32>
    %cst_13 = arith.constant 1.280000e+02 : f32
    %33 = vector.broadcast %cst_13 : f32 to vector<16x1xf32>
    %34 = arith.divf %32, %33 : vector<16x1xf32>
    %cst_14 = arith.constant 9.99999974E-6 : f32
    %35 = vector.broadcast %cst_14 : f32 to vector<16x1xf32>
    %36 = arith.addf %34, %35 : vector<16x1xf32>
    %37 = math.rsqrt %36 : vector<16x1xf32>
    %38 = vector.broadcast %37 : vector<16x1xf32> to vector<16x128xf32>
    %39 = arith.mulf %29, %38 : vector<16x128xf32>
    %40 = vector.extract_strided_slice %17 {offsets = [1, 0], sizes = [1, 128], strides = [1, 1]} : vector<3x128xf32> to vector<1x128xf32>
    %41 = vector.broadcast %40 : vector<1x128xf32> to vector<16x128xf32>
    %42 = arith.mulf %39, %41 : vector<16x128xf32>
    %43 = vector.extract_strided_slice %17 {offsets = [2, 0], sizes = [1, 128], strides = [1, 1]} : vector<3x128xf32> to vector<1x128xf32>
    %44 = vector.broadcast %43 : vector<1x128xf32> to vector<16x128xf32>
    %45 = arith.addf %42, %44 : vector<16x128xf32>
    %c0_15 = arith.constant 0 : index
    %c0_16 = arith.constant 0 : index
    %46 = vector.load %arg4[%c0_15, %c0_16] : memref<16x128xf32, #tpu.memory_space<vmem>>, vector<16x128xf32>
    tpu.vector_store %arg4[%c0_15, %c0_16], %45 {strides = array<i32>} : memref<16x128xf32, #tpu.memory_space<vmem>>, vector<16x128xf32>,
    return
  }
  func.func @transform_0(%arg0: i32) -> (i32, i32) {
    %c0_i32 = arith.constant 0 : i32
    %c0_i32_0 = arith.constant 0 : i32
    return %arg0, %c0_i32 : i32, i32
  }
  func.func @transform_1(%arg0: i32) -> (i32, i32) {
    %c0_i32 = arith.constant 0 : i32
    %c0_i32_0 = arith.constant 0 : i32
    %c0_i32_1 = arith.constant 0 : i32
    return %c0_i32, %c0_i32_0 : i32, i32
  }
  func.func @transform_2(%arg0: i32) -> (i32, i32) {
    %c0_i32 = arith.constant 0 : i32
    %c0_i32_0 = arith.constant 0 : i32
    %c0_i32_1 = arith.constant 0 : i32
    return %c0_i32, %c0_i32_0 : i32, i32
  }
  func.func @transform_3(%arg0: i32) -> (i32, i32) {
    %c0_i32 = arith.constant 0 : i32
    %c0_i32_0 = arith.constant 0 : i32
    return %arg0, %c0_i32 : i32, i32
  }
}

</mosaic_0001>

<llo_original>
// kernel: tpu_custom_call.1
$region0: #{tpu_custom_call.1}
  #allocation0 [shape = 'u32[]', space=smem, size = 0x4, offset = 0x4, fixed_abs, tag = 'smem constant byte address 0x4 - core index']
  #allocation1 [shape = 'u32[144,128]{1,0:T(1,128)}', space=vmem, size = 0x12000, scoped, tag = 'internal scratch']
  %s0 = inlined_call_operand.hbm [shape: f32[16,128], index: 0, kind: input, shape index: {}]
  %s1 = inlined_call_operand.hbm [shape: bf16[128,128], index: 1, kind: input, shape index: {}]
  %s2 = inlined_call_operand.vmem [shape: f32[3,128], index: 2, kind: input, shape index: {}]
  %s3 = inlined_call_operand.hbm [shape: f32[16,128], index: 3, kind: output, shape index: {}]
  %s4 = sld [smem:[#allocation0]]
  $region30: #{tpu_custom_call.1} parent=0
    _
  %s6 = ssub.s32 1, %s4
  %s7 = scalar_select 0, %s6, %s4
  $region1: #{tpu_custom_call.1} parent=0
    #allocation2 [shape = 'u8[8192]{0}', space=vmem, size = 0x2000, scoped, tag = 'input window, operand 0, single buffered']
    #allocation3 [shape = 's32[1]{0}', space=sflag, size = 0x4, scoped, tag = 'scoped memory for tpu_custom_call.1']
    #allocation4 [shape = 's32[1]{0}', space=sflag, size = 0x4, scoped, tag = 'scoped memory for tpu_custom_call.1']
    #allocation5 [shape = 'u8[32768]{0}', space=vmem, size = 0x8000, scoped, tag = 'input window, operand 1, single buffered']
    #allocation6 [shape = 's32[1]{0}', space=sflag, size = 0x4, scoped, tag = 'scoped memory for tpu_custom_call.1']
    #allocation7 [shape = 'u8[8192]{0}', space=vmem, size = 0x2000, scoped, tag = 'output window, operand 0, single buffered']
    %8 = vsyncpa [#allocation3], 0
    %9 = vsyncpa [#allocation6], 0
    %10 = vsyncpa [#allocation4], 0
    // Predicated region
    $region2: #{tpu_custom_call.1} parent=1 // pred_check
      _
    $region3: #{tpu_custom_call.1} parent=1 // pred_check_branch
      %12 = sbr.rel (0) target = $region5
    $region4: #{tpu_custom_call.1} parent=1 // pred_region
      %s14 = ssub.s32 256, 256
      %15 = vsyncadd [#allocation3], %s14
      %s16 = sshll.u32 [#allocation2], 4
      %s17 = int_to_ptr.vmem [resolvable:$true] %s16
      %22 = dma.hbm_to_vmem [thread:$0]  %s0, 256, %s17, [#allocation3], 128, 128, 8
    $region5: #{tpu_custom_call.1} parent=1 // pred_fallthru
      _
    // Predicated region
    $region6: #{tpu_custom_call.1} parent=1 // pred_check
      _
    $region7: #{tpu_custom_call.1} parent=1 // pred_check_branch
      %24 = sbr.rel (0) target = $region9
    $region8: #{tpu_custom_call.1} parent=1 // pred_region
      %s26 = ssub.s32 1024, 1024
      %27 = vsyncadd [#allocation6], %s26
      %s28 = sshll.u32 [#allocation5], 4
      %s29 = int_to_ptr.vmem [resolvable:$true] %s28
      %34 = dma.hbm_to_vmem [thread:$0]  %s1, 1024, %s29, [#allocation6], 64, 64, 4
    $region9: #{tpu_custom_call.1} parent=1 // pred_fallthru
      _
    // Predicated region
    $region10: #{tpu_custom_call.1} parent=1 // pred_check
      _
    $region11: #{tpu_custom_call.1} parent=1 // pred_check_branch
      %36 = sbr.rel (0) target = $region13
    $region12: #{tpu_custom_call.1} parent=1 // pred_region
      _
    $region13: #{tpu_custom_call.1} parent=1 // pred_fallthru
      _
    // Predicated region
    $region14: #{tpu_custom_call.1} parent=1 // pred_check
      _
    $region15: #{tpu_custom_call.1} parent=1 // pred_check_branch
      %38 = sbr.rel (0) target = $region17
    $region16: #{tpu_custom_call.1} parent=1 // pred_region
      %39 = dma.done [#allocation3], 256
    $region17: #{tpu_custom_call.1} parent=1 // pred_fallthru
      _
    // Predicated region
    $region18: #{tpu_custom_call.1} parent=1 // pred_check
      _
    $region19: #{tpu_custom_call.1} parent=1 // pred_check_branch
      %41 = sbr.rel (0) target = $region21
    $region20: #{tpu_custom_call.1} parent=1 // pred_region
      %42 = dma.done [#allocation6], 1024
    $region21: #{tpu_custom_call.1} parent=1 // pred_fallthru
      _
    %v44 = vld [vmem:[#allocation2] sm:$0xff]
    %v45 = vld [vmem:[#allocation2 + $0x8] sm:$0xff]
    %46 = vadd.xlane.f32.xlu0 %v44
    %v47 = vpop.xlane.xlu0 %46
    %48 = vadd.xlane.f32.xlu0 %v45
    %v49 = vpop.xlane.xlu0 %48
    %v50 = vrcp.pop 128.0
    %v51 = vmul.f32 %v47, %v50
    %v52 = vmul.f32 %v49, %v50
    %v53 = vsub.f32 %v44, %v51
    %v54 = vsub.f32 %v45, %v52
    %v55 = vmul.f32 %v53, %v53
    %v56 = vmul.f32 %v54, %v54
    %57 = vadd.xlane.f32.xlu0 %v55
    %v58 = vpop.xlane.xlu0 %57
    %59 = vadd.xlane.f32.xlu0 %v56
    %v60 = vpop.xlane.xlu0 %59
    %v61 = vmul.f32 %v58, %v50
    %v62 = vmul.f32 %v60, %v50
    %v63 = vadd.f32 %v61, 1e-05
    %v64 = vadd.f32 %v62, 1e-05
    %v65 = vrsqrt.pop %v63
    %v66 = vrsqrt.pop %v64
    %v67 = vmul.f32 %v53, %v65
    %v68 = vmul.f32 %v54, %v66
    %v69 = vld [vmem:[%s2] sm:$0x7]
    %v70 = vpack.c.bf16 %v68, %v67
    %v71 = vld [vmem:[#allocation5] sm:$0xf]
    %v72 = vld [vmem:[#allocation5 + $0x4] sm:$0xf]
    %v73 = vld [vmem:[#allocation5 + $0x8] sm:$0xf]
    %v74 = vld [vmem:[#allocation5 + $0xc] sm:$0xf]
    %v75 = vld [vmem:[#allocation5 + $0x10] sm:$0xf]
    %v76 = vld [vmem:[#allocation5 + $0x14] sm:$0xf]
    %v77 = vld [vmem:[#allocation5 + $0x18] sm:$0xf]
    %v78 = vld [vmem:[#allocation5 + $0x1c] sm:$0xf]
    %v79 = vld [vmem:[#allocation5 + $0x20] sm:$0xf]
    %v80 = vld [vmem:[#allocation5 + $0x24] sm:$0xf]
    %v81 = vld [vmem:[#allocation5 + $0x28] sm:$0xf]
    %v82 = vld [vmem:[#allocation5 + $0x2c] sm:$0xf]
    %v83 = vld [vmem:[#allocation5 + $0x30] sm:$0xf]
    %v84 = vld [vmem:[#allocation5 + $0x34] sm:$0xf]
    %v85 = vld [vmem:[#allocation5 + $0x38] sm:$0xf]
    %v86 = vld [vmem:[#allocation5 + $0x3c] sm:$0xf]
    %v87 = vlaneseq
    %v88 = vshrl.u32 %v87, 7
    %v89 = vsub.s32 0, %v88
    %v90 = vrot.slane %v69, %v89
    %v107 = vunpack.c.l.b16 %v71
    %v108 = vunpack.c.l.b16 %v72
    %v109 = vunpack.c.l.b16 %v73
    %v110 = vunpack.c.l.b16 %v74
    %v111 = vunpack.c.l.b16 %v75
    %v112 = vunpack.c.l.b16 %v76
    %v113 = vunpack.c.l.b16 %v77
    %v114 = vunpack.c.l.b16 %v78
    %v115 = vunpack.c.l.b16 %v79
    %v116 = vunpack.c.l.b16 %v80
    %v117 = vunpack.c.l.b16 %v81
    %v118 = vunpack.c.l.b16 %v82
    %v119 = vunpack.c.l.b16 %v83
    %v120 = vunpack.c.l.b16 %v84
    %v121 = vunpack.c.l.b16 %v85
    %v122 = vunpack.c.l.b16 %v86
    %v123 = vpack.c.b16 %v108, %v107
    %v124 = vpack.c.b16 %v110, %v109
    %v125 = vpack.c.b16 %v112, %v111
    %v126 = vpack.c.b16 %v114, %v113
    %v127 = vpack.c.b16 %v116, %v115
    %v128 = vpack.c.b16 %v118, %v117
    %v129 = vpack.c.b16 %v120, %v119
    %v130 = vpack.c.b16 %v122, %v121
    %139 = vmatprep.subr.bf16.mxu0 0
    %140 = vmatpush1.bf16.msra.mxu0 %v123
    %141 = vmatprep.subr.bf16.mxu0 0
    %142 = vmatpush1.bf16.msra.mxu0 %v124
    %143 = vmatprep.subr.bf16.mxu0 0
    %144 = vmatpush1.bf16.msra.mxu0 %v125
    %145 = vmatprep.subr.bf16.mxu0 0
    %146 = vmatpush1.bf16.msra.mxu0 %v126
    %147 = vmatprep.subr.bf16.mxu0 0
    %148 = vmatpush1.bf16.msra.mxu0 %v127
    %149 = vmatprep.subr.bf16.mxu0 0
    %150 = vmatpush1.bf16.msra.mxu0 %v128
    %151 = vmatprep.subr.bf16.mxu0 0
    %152 = vmatpush1.bf16.msra.mxu0 %v129
    %153 = vmatprep.subr.bf16.mxu0 0
    %154 = vmatpush1.bf16.msra.mxu0 %v130
    %155 = vmatprep.subr.bf16.mxu0 0
    %156 = vmatpush1.bf16.msra.mxu0 0
    %157 = vmatprep.subr.bf16.mxu0 0
    %158 = vmatpush1.bf16.msra.mxu0 0
    %159 = vmatprep.subr.bf16.mxu0 0
    %160 = vmatpush1.bf16.msra.mxu0 0
    %161 = vmatprep.subr.bf16.mxu0 0
    %162 = vmatpush1.bf16.msra.mxu0 0
    %163 = vmatprep.subr.bf16.mxu0 0
    %164 = vmatpush1.bf16.msra.mxu0 0
    %165 = vmatprep.subr.bf16.mxu0 0
    %166 = vmatpush1.bf16.msra.mxu0 0
    %167 = vmatprep.subr.bf16.mxu0 0
    %168 = vmatpush1.bf16.msra.mxu0 0
    %169 = vmatprep.subr.bf16.mxu0 0
    %170 = vmatpush1.bf16.msra.mxu0 0
    %171 = vmatprep.mubr.bf16.mxu0 0
    %172 = vmatmul.mubr.bf16.gmra.mrb[0].mxu0 %v70
    %v173 = vpop.f32.mrb[0].mxu0
    %v174 = vadd.f32 %v90, %v173
    %v175 = vpop.f32.mrb[0].mxu0
    %v176 = vpop.f32.mrb[0].mxu0
    %v177 = vadd.f32 %v90, %v176
    %v178 = vpop.f32.mrb[0].mxu0
    %179 = vdwg.mxu0
    %180 = vadd.xlane.f32.xlu0 %v174
    %v181 = vpop.xlane.xlu0 %180
    %182 = vadd.xlane.f32.xlu0 %v177
    %v183 = vpop.xlane.xlu0 %182
    %v184 = vmul.f32 %v181, %v50
    %v185 = vmul.f32 %v183, %v50
    %v186 = vsub.f32 %v174, %v184
    %v187 = vsub.f32 %v177, %v185
    %v188 = vmul.f32 %v186, %v186
    %v189 = vmul.f32 %v187, %v187
    %190 = vadd.xlane.f32.xlu0 %v188
    %v191 = vpop.xlane.xlu0 %190
    %192 = vadd.xlane.f32.xlu0 %v189
    %v193 = vpop.xlane.xlu0 %192
    %v194 = vmul.f32 %v191, %v50
    %v195 = vmul.f32 %v193, %v50
    %v196 = vadd.f32 %v194, 1e-05
    %v197 = vadd.f32 %v195, 1e-05
    %v198 = vrsqrt.pop %v196
    %v199 = vrsqrt.pop %v197
    %v200 = vmul.f32 %v186, %v198
    %v201 = vmul.f32 %v187, %v199
    %v202 = vlaneseq
    %v203 = vshrl.u32 %v202, 7
    %v204 = vsub.s32 1, %v203
    %v205 = vrot.slane %v69, %v204
    %v206 = vmul.f32 %v200, %v205
    %v207 = vmul.f32 %v201, %v205
    %v208 = vlaneseq
    %v209 = vshrl.u32 %v208, 7
    %v210 = vsub.s32 2, %v209
    %v211 = vrot.slane %v69, %v210
    %v212 = vadd.f32 %v206, %v211
    %v213 = vadd.f32 %v207, %v211
    %214 = vst [vmem:[#allocation7] sm:$0xff] %v212
    %215 = vst [vmem:[#allocation7 + $0x8] sm:$0xff] %v213
    // Predicated region
    $region22: #{tpu_custom_call.1} parent=1 // pred_check
      _
    $region23: #{tpu_custom_call.1} parent=1 // pred_check_branch
      %217 = sbr.rel (0) target = $region25
    $region24: #{tpu_custom_call.1} parent=1 // pred_region
      %s219 = ssub.s32 256, 256
      %220 = vsyncadd [#allocation4], %s219
      %s221 = sshll.u32 [#allocation7], 4
      %s222 = int_to_ptr.vmem [resolvable:$true] %s221
      %227 = dma.vmem_to_hbm [thread:$0]  %s222, 256, %s3, [#allocation4], 128, 128, 8
    $region25: #{tpu_custom_call.1} parent=1 // pred_fallthru
      _
    // Predicated region
    $region26: #{tpu_custom_call.1} parent=1 // pred_check
      _
    $region27: #{tpu_custom_call.1} parent=1 // pred_check_branch
      %229 = sbr.rel (0) target = $region29
    $region28: #{tpu_custom_call.1} parent=1 // pred_region
      %230 = dma.done [#allocation4], 256
    $region29: #{tpu_custom_call.1} parent=1 // pred_fallthru
      _
    %231 = vsyncpa [#allocation3], 1
    %232 = vsyncpa [#allocation6], 1
    %233 = vsyncpa [#allocation4], 1

</llo_original>
